<compile_context>
chip_gen: v7x
topology: tpu7x:2x2x1
jax: 0.10.0
libtpu: 0.0.40
codegen_flags: <defaults>
</compile_context>

<pallas_src>
import functools

import jax
import jax.numpy as jnp
from jax.experimental import pallas as pl
from jax.experimental.pallas import tpu as pltpu

LANE = 128


def _round_up(x, m):
    return (x + m - 1) // m * m


def _vmem():
    return pl.BlockSpec(memory_space=pltpu.MemorySpace.VMEM)


def _sgc_fused_kernel(k, relu_flags, adj_ref, x_ref, *refs):
    """Fused SGC forward: k-hop normalized propagation + linear head, one kernel."""
    *wb_refs, out_ref = refs

    adj = adj_ref[...]                              # (N, N) f32, adj[dst, src] in {0,1}
    a = adj.astype(jnp.bfloat16)                    # exact for 0/1 entries
    # In-degree / norm computed in-kernel: XLU reduce + EUP rsqrt (free-ish slots).
    deg = jnp.sum(adj, axis=1, keepdims=True)       # (N, 1)
    norm = jax.lax.rsqrt(jnp.maximum(deg, 1.0))     # clamp(deg, 1) ** -0.5
    norm2 = norm * norm

    h = x_ref[...]                                  # (N, F) f32 node features

    # k-step propagation:  (D^-1/2 A D^-1/2)^k h, with interior scalings fused
    # into a single norm^2 multiply between hops (saves k-1 VPU passes).
    h = h * norm
    for hop in range(k):
        h = jnp.dot(a, h.astype(jnp.bfloat16), preferred_element_type=jnp.float32)
        if hop + 1 < k:
            h = h * norm2
    h = h * norm

    # fused linear head: SGConv.fc (+ optional MLP linears; ReLU where flagged)
    for i, do_relu in enumerate(relu_flags):
        w = wb_refs[2 * i][...]                     # (Fin[, padded], Fout_p) bf16
        b = wb_refs[2 * i + 1][...]                 # (1, Fout_p) f32
        h = jnp.dot(h.astype(jnp.bfloat16), w,
                    preferred_element_type=jnp.float32) + b
        if do_relu:
            h = jnp.maximum(h, 0.0)

    out_ref[...] = h                                # lane-dense store (Fout_p % 128 == 0)


def _relu_flags(mlp_layers):
    # No activation after SGConv.fc; MLP applies ReLU after every layer but its last.
    if mlp_layers <= 1:
        return (False,)
    n_mlp = mlp_layers - 1
    return (False,) + (True,) * (n_mlp - 1) + (False,)


def _linear_dims(in_feats, h_feats, num_classes, mlp_layers):
    if mlp_layers <= 1:
        return [(in_feats, num_classes)]
    n_mlp = mlp_layers - 1
    # MLP(h_feats, num_classes, num_classes, n_mlp): hidden width == num_classes.
    dims = [(in_feats, h_feats), (h_feats, num_classes)]
    dims += [(num_classes, num_classes)] * (n_mlp - 1)
    return dims


def _xavier_uniform(key, fan_in, fan_out):
    bound = (6.0 / (fan_in + fan_out)) ** 0.5
    return jax.random.uniform(key, (fan_in, fan_out), jnp.float32, -bound, bound)


def _torch_linear_init(key, fan_in, fan_out):
    kw, kb = jax.random.split(key)
    bound = 1.0 / (fan_in ** 0.5)
    w = jax.random.uniform(kw, (fan_in, fan_out), jnp.float32, -bound, bound)
    b = jax.random.uniform(kb, (fan_out,), jnp.float32, -bound, bound)
    return w, b


def _pad_params(params):
    """Pad / cast weights ONCE at build time (out dims to 128 for lane-dense matmuls,
    in dims of later layers padded with zero rows to match)."""
    flat = []
    prev_pad = 0
    for (w, b) in params:
        fi, fo = w.shape
        fo_p = _round_up(fo, LANE)
        w_p = jnp.pad(w, ((0, prev_pad), (0, fo_p - fo))).astype(jnp.bfloat16)
        b_p = jnp.pad(b[None, :], ((0, 0), (0, fo_p - fo))).astype(jnp.float32)
        flat += [w_p, b_p]
        prev_pad = fo_p - fo
    return flat


def build_sgc(in_feats, h_feats=32, num_classes=2, k=2, mlp_layers=1, *, key):
    """Returns (params, padded_params, forward) mirroring models.gnn.SGC
    with dropout_rate=0 (dropout == Identity)."""
    dims = _linear_dims(in_feats, h_feats, num_classes, mlp_layers)
    relu_flags = _relu_flags(mlp_layers)

    params = []
    for li, (fi, fo) in enumerate(dims):
        key, sub = jax.random.split(key)
        if li == 0:
            # DGL SGConv: xavier_uniform_ weight, zero bias.
            w = _xavier_uniform(sub, fi, fo)
            b = jnp.zeros((fo,), jnp.float32)
        else:
            w, b = _torch_linear_init(sub, fi, fo)
        params.append((w, b))

    padded_params = _pad_params(params)              # hoisted out of forward
    out_dim = dims[-1][1]
    out_p = _round_up(out_dim, LANE)

    kernel = functools.partial(_sgc_fused_kernel, k, relu_flags)

    @jax.jit
    def forward(padded_params, feat, adj):
        n, fin = feat.shape

        # Advisory cost estimate for XLA scheduling around the custom call.
        flops = 2 * k * n * n * fin
        bytes_acc = adj.size * 4 + feat.size * 4 + n * out_p * 4
        for i in range(0, len(padded_params), 2):
            wi, wo = padded_params[i].shape
            flops += 2 * n * wi * wo
            bytes_acc += padded_params[i].size * 2 + padded_params[i + 1].size * 4
        ce = pl.CostEstimate(flops=flops, transcendentals=n,
                             bytes_accessed=bytes_acc)

        out = pl.pallas_call(
            kernel,
            out_shape=jax.ShapeDtypeStruct((n, out_p), jnp.float32),
            in_specs=[_vmem()] * (2 + len(padded_params)),
            out_specs=_vmem(),
            cost_estimate=ce,
        )(adj, feat, *padded_params)
        return out[:, :out_dim]

    return params, padded_params, forward


def sgc_reference(params, feat, adj, k, relu_flags):
    """Pure-JAX f32 reference (DGL SGConv + optional MLP head)."""
    deg = jnp.sum(adj, axis=1, keepdims=True)
    norm = jax.lax.rsqrt(jnp.maximum(deg, 1.0))
    h = feat
    for _ in range(k):
        h = h * norm
        h = adj @ h
        h = h * norm
    for (w, b), do_relu in zip(params, relu_flags):
        h = h @ w + b
        if do_relu:
            h = jnp.maximum(h, 0.0)
    return h


if __name__ == "__main__":
    N, IN_FEATS, H_FEATS, NUM_CLASSES, K, MLP_LAYERS = 64, 16, 32, 2, 2, 1

    key = jax.random.PRNGKey(0)
    kf, kp = jax.random.split(key)

    # node features (graph.ndata['feature'])
    feat = jax.random.normal(kf, (N, IN_FEATS), jnp.float32)

    # deterministic ring graph with self-loops: edges i->i, (i+1)->i, (i-1)->i
    idx = jnp.arange(N)
    adj = jnp.zeros((N, N), jnp.float32)
    adj = adj.at[idx, idx].set(1.0)
    adj = adj.at[idx, (idx + 1) % N].set(1.0)
    adj = adj.at[idx, (idx - 1) % N].set(1.0)

    params, padded_params, forward = build_sgc(
        IN_FEATS, h_feats=H_FEATS, num_classes=NUM_CLASSES,
        k=K, mlp_layers=MLP_LAYERS, key=kp)

    out = jax.block_until_ready(forward(padded_params, feat, adj))
    assert out.shape == (N, NUM_CLASSES) and out.dtype == jnp.float32

    ref = sgc_reference(params, feat, adj, K, _relu_flags(MLP_LAYERS))
    max_err = float(jnp.max(jnp.abs(out - ref)))
    assert jnp.allclose(out, ref, rtol=5e-2, atol=5e-2), max_err

    print("KERNEL_OK")
</pallas_src>

<mosaic_0001>
module attributes {stable_mosaic.version = 11 : i64} {
  func.func @_sgc_fused_kernel(%arg0: memref<64x64xf32, #tpu.memory_space<vmem>>, %arg1: memref<64x16xf32, #tpu.memory_space<vmem>>, %arg2: memref<16x128xbf16, #tpu.memory_space<vmem>>, %arg3: memref<1x128xf32, #tpu.memory_space<vmem>>, %arg4: memref<64x128xf32, #tpu.memory_space<vmem>>) attributes {dimension_semantics = [], scalar_prefetch = 0 : i64, scratch_operands = 0 : i64, tpu.core_type = #tpu.core_type<tc>} {
    %c0 = arith.constant 0 : index
    %c0_0 = arith.constant 0 : index
    %0 = vector.load %arg0[%c0, %c0_0] : memref<64x64xf32, #tpu.memory_space<vmem>>, vector<64x64xf32>
    %1 = arith.truncf %0 : vector<64x64xf32> to vector<64x64xbf16>
    %cst = arith.constant dense<0.000000e+00> : vector<64xf32>
    %2 = vector.multi_reduction <add>, %0, %cst [1] : vector<64x64xf32> to vector<64xf32>
    %3 = vector.shape_cast %2 : vector<64xf32> to vector<64x1xf32>
    %cst_1 = arith.constant 1.000000e+00 : f32
    %4 = vector.broadcast %cst_1 : f32 to vector<64x1xf32>
    %5 = arith.maximumf %3, %4 : vector<64x1xf32>
    %6 = math.rsqrt %5 : vector<64x1xf32>
    %7 = arith.mulf %6, %6 : vector<64x1xf32>
    %c0_2 = arith.constant 0 : index
    %c0_3 = arith.constant 0 : index
    %8 = vector.load %arg1[%c0_2, %c0_3] : memref<64x16xf32, #tpu.memory_space<vmem>>, vector<64x16xf32>
    %9 = vector.broadcast %6 : vector<64x1xf32> to vector<64x16xf32>
    %10 = arith.mulf %8, %9 : vector<64x16xf32>
    %11 = arith.truncf %10 : vector<64x16xf32> to vector<64x16xbf16>
    %cst_4 = arith.constant dense<0.000000e+00> : vector<64x16xf32>
    %12 = tpu.matmul %1, %11, %cst_4 {dimension_numbers = #tpu.dot_dimension_numbers<[1], [0], [0], [1], [0, 0, 1, 1], [], []>} : vector<64x64xbf16>, vector<64x16xbf16>, vector<64x16xf32> -> vector<64x16xf32>
    %13 = vector.broadcast %7 : vector<64x1xf32> to vector<64x16xf32>
    %14 = arith.mulf %12, %13 : vector<64x16xf32>
    %15 = arith.truncf %14 : vector<64x16xf32> to vector<64x16xbf16>
    %cst_5 = arith.constant dense<0.000000e+00> : vector<64x16xf32>
    %16 = tpu.matmul %1, %15, %cst_5 {dimension_numbers = #tpu.dot_dimension_numbers<[1], [0], [0], [1], [0, 0, 1, 1], [], []>} : vector<64x64xbf16>, vector<64x16xbf16>, vector<64x16xf32> -> vector<64x16xf32>
    %17 = vector.broadcast %6 : vector<64x1xf32> to vector<64x16xf32>
    %18 = arith.mulf %16, %17 : vector<64x16xf32>
    %c0_6 = arith.constant 0 : index
    %c0_7 = arith.constant 0 : index
    %19 = vector.load %arg2[%c0_6, %c0_7] : memref<16x128xbf16, #tpu.memory_space<vmem>>, vector<16x128xbf16>
    %c0_8 = arith.constant 0 : index
    %c0_9 = arith.constant 0 : index
    %20 = vector.load %arg3[%c0_8, %c0_9] : memref<1x128xf32, #tpu.memory_space<vmem>>, vector<1x128xf32>
    %21 = arith.truncf %18 : vector<64x16xf32> to vector<64x16xbf16>
    %cst_10 = arith.constant dense<0.000000e+00> : vector<64x128xf32>
    %22 = tpu.matmul %21, %19, %cst_10 {dimension_numbers = #tpu.dot_dimension_numbers<[1], [0], [0], [1], [0, 0, 1, 1], [], []>} : vector<64x16xbf16>, vector<16x128xbf16>, vector<64x128xf32> -> vector<64x128xf32>
    %23 = vector.broadcast %20 : vector<1x128xf32> to vector<64x128xf32>
    %24 = arith.addf %22, %23 : vector<64x128xf32>
    %c0_11 = arith.constant 0 : index
    %c0_12 = arith.constant 0 : index
    %25 = vector.load %arg4[%c0_11, %c0_12] : memref<64x128xf32, #tpu.memory_space<vmem>>, vector<64x128xf32>
    tpu.vector_store %arg4[%c0_11, %c0_12], %24 {strides = array<i32>} : memref<64x128xf32, #tpu.memory_space<vmem>>, vector<64x128xf32>,
    return
  }
}

</mosaic_0001>

<llo_original>
// kernel: forward.1
$region0: #{forward.1}
  #allocation0 [shape = 'u32[]', space=smem, size = 0x4, offset = 0x4, fixed_abs, tag = 'smem constant byte address 0x4 - core index']
  #allocation1 [shape = 'u32[144,128]{1,0:T(1,128)}', space=vmem, size = 0x12000, scoped, tag = 'internal scratch']
  %s0 = inlined_call_operand.vmem [shape: f32[64,64], index: 0, kind: input, shape index: {}]
  %s1 = inlined_call_operand.vmem [shape: f32[64,16], index: 1, kind: input, shape index: {}]
  %s2 = inlined_call_operand.vmem [shape: bf16[16,128], index: 2, kind: input, shape index: {}]
  %s3 = inlined_call_operand.vmem [shape: f32[1,128], index: 3, kind: input, shape index: {}]
  %s4 = inlined_call_operand.vmem [shape: f32[64,128], index: 4, kind: output, shape index: {}]
  %s5 = sld [smem:[#allocation0]]
  $region26: #{forward.1} parent=0
    _
  %s7 = ssub.s32 1, %s5
  %s8 = scalar_select 0, %s7, %s5
  // Predicated region
  $region2: #{forward.1} parent=0 // pred_check
    _
  $region3: #{forward.1} parent=0 // pred_check_branch
    %10 = sbr.rel (0) target = $region5
  $region4: #{forward.1} parent=0 // pred_region
    _
  $region5: #{forward.1} parent=0 // pred_fallthru
    _
  // Predicated region
  $region6: #{forward.1} parent=0 // pred_check
    _
  $region7: #{forward.1} parent=0 // pred_check_branch
    %12 = sbr.rel (0) target = $region9
  $region8: #{forward.1} parent=0 // pred_region
    _
  $region9: #{forward.1} parent=0 // pred_fallthru
    _
  // Predicated region
  $region10: #{forward.1} parent=0 // pred_check
    _
  $region11: #{forward.1} parent=0 // pred_check_branch
    %14 = sbr.rel (0) target = $region13
  $region12: #{forward.1} parent=0 // pred_region
    _
  $region13: #{forward.1} parent=0 // pred_fallthru
    _
  // Predicated region
  $region14: #{forward.1} parent=0 // pred_check
    _
  $region15: #{forward.1} parent=0 // pred_check_branch
    %16 = sbr.rel (0) target = $region17
  $region16: #{forward.1} parent=0 // pred_region
    _
  $region17: #{forward.1} parent=0 // pred_fallthru
    _
  %v18 = vld [vmem:[%s0] sm:$0xff]
  %v19 = vld [vmem:[%s0 + $0x8] sm:$0xff]
  %v20 = vld [vmem:[%s0 + $0x10] sm:$0xff]
  %v21 = vld [vmem:[%s0 + $0x18] sm:$0xff]
  %v22 = vld [vmem:[%s0 + $0x20] sm:$0xff]
  %v23 = vld [vmem:[%s0 + $0x28] sm:$0xff]
  %v24 = vld [vmem:[%s0 + $0x30] sm:$0xff]
  %v25 = vld [vmem:[%s0 + $0x38] sm:$0xff]
  %v26 = vpack.c.bf16 %v19, %v18
  %v27 = vpack.c.bf16 %v21, %v20
  %v28 = vpack.c.bf16 %v23, %v22
  %v29 = vpack.c.bf16 %v25, %v24
  %vm30 = vcmask 523264
  %v31 = vsel %vm30, %v18, 0.0
  %32 = vadd.xlane.f32.xlu0 %v31
  %v33 = vpop.xlane.xlu0 %32
  %v34 = vsel %vm30, %v19, 0.0
  %35 = vadd.xlane.f32.xlu0 %v34
  %v36 = vpop.xlane.xlu0 %35
  %v37 = vsel %vm30, %v20, 0.0
  %38 = vadd.xlane.f32.xlu0 %v37
  %v39 = vpop.xlane.xlu0 %38
  %v40 = vsel %vm30, %v21, 0.0
  %41 = vadd.xlane.f32.xlu0 %v40
  %v42 = vpop.xlane.xlu0 %41
  %v43 = vsel %vm30, %v22, 0.0
  %44 = vadd.xlane.f32.xlu0 %v43
  %v45 = vpop.xlane.xlu0 %44
  %v46 = vsel %vm30, %v23, 0.0
  %47 = vadd.xlane.f32.xlu0 %v46
  %v48 = vpop.xlane.xlu0 %47
  %v49 = vsel %vm30, %v24, 0.0
  %50 = vadd.xlane.f32.xlu0 %v49
  %v51 = vpop.xlane.xlu0 %50
  %v52 = vsel %vm30, %v25, 0.0
  %53 = vadd.xlane.f32.xlu0 %v52
  %v54 = vpop.xlane.xlu0 %53
  %v55 = vmax.f32 %v33, 1.0
  %v56 = vmax.f32 %v36, 1.0
  %v57 = vmax.f32 %v39, 1.0
  %v58 = vmax.f32 %v42, 1.0
  %v59 = vmax.f32 %v45, 1.0
  %v60 = vmax.f32 %v48, 1.0
  %v61 = vmax.f32 %v51, 1.0
  %v62 = vmax.f32 %v54, 1.0
  %v63 = vrsqrt.pop %v55
  %v64 = vrsqrt.pop %v56
  %v65 = vrsqrt.pop %v57
  %v66 = vrsqrt.pop %v58
  %v67 = vrsqrt.pop %v59
  %v68 = vrsqrt.pop %v60
  %v69 = vrsqrt.pop %v61
  %v70 = vrsqrt.pop %v62
  %v71 = vmul.f32 %v63, %v63
  %v72 = vmul.f32 %v64, %v64
  %v73 = vmul.f32 %v65, %v65
  %v74 = vmul.f32 %v66, %v66
  %v75 = vmul.f32 %v67, %v67
  %v76 = vmul.f32 %v68, %v68
  %v77 = vmul.f32 %v69, %v69
  %v78 = vmul.f32 %v70, %v70
  %v79 = vld [vmem:[%s1] sm:$0xff]
  %v80 = vld [vmem:[%s1 + $0x8] sm:$0xff]
  %v81 = vld [vmem:[%s1 + $0x10] sm:$0xff]
  %v82 = vld [vmem:[%s1 + $0x18] sm:$0xff]
  %v83 = vld [vmem:[%s1 + $0x20] sm:$0xff]
  %v84 = vld [vmem:[%s1 + $0x28] sm:$0xff]
  %v85 = vld [vmem:[%s1 + $0x30] sm:$0xff]
  %v86 = vld [vmem:[%s1 + $0x38] sm:$0xff]
  %v87 = vmul.f32 %v79, %v63
  %v88 = vmul.f32 %v80, %v64
  %v89 = vmul.f32 %v81, %v65
  %v90 = vmul.f32 %v82, %v66
  %v91 = vmul.f32 %v83, %v67
  %v92 = vmul.f32 %v84, %v68
  %v93 = vmul.f32 %v85, %v69
  %v94 = vmul.f32 %v86, %v70
  %v95 = vpack.c.bf16 %v88, %v87
  %v96 = vpack.c.bf16 %v90, %v89
  %v97 = vpack.c.bf16 %v92, %v91
  %v98 = vpack.c.bf16 %v94, %v93
  %v100 = vsel %vm30, %v26, 0
  %v103 = vsel %vm30, %v27, 0
  %v106 = vsel %vm30, %v28, 0
  %v109 = vsel %vm30, %v29, 0
  %111 = vmatprep.subr.bf16.mxu0 0
  %112 = vmatpush1.bf16.msra.mxu0 %v95
  %113 = vmatprep.subr.bf16.mxu0 0
  %114 = vmatpush1.bf16.msra.mxu0 %v96
  %115 = vmatprep.subr.bf16.mxu0 0
  %116 = vmatpush1.bf16.msra.mxu0 %v97
  %117 = vmatprep.subr.bf16.mxu0 0
  %118 = vmatpush1.bf16.msra.mxu0 %v98
  %119 = vmatprep.subr.bf16.mxu0 0
  %120 = vmatpush1.bf16.msra.mxu0 0
  %121 = vmatprep.subr.bf16.mxu0 0
  %122 = vmatpush1.bf16.msra.mxu0 0
  %123 = vmatprep.subr.bf16.mxu0 0
  %124 = vmatpush1.bf16.msra.mxu0 0
  %125 = vmatprep.subr.bf16.mxu0 0
  %126 = vmatpush1.bf16.msra.mxu0 0
  %127 = vmatprep.subr.bf16.mxu0 0
  %128 = vmatpush1.bf16.msra.mxu0 0
  %129 = vmatprep.subr.bf16.mxu0 0
  %130 = vmatpush1.bf16.msra.mxu0 0
  %131 = vmatprep.subr.bf16.mxu0 0
  %132 = vmatpush1.bf16.msra.mxu0 0
  %133 = vmatprep.subr.bf16.mxu0 0
  %134 = vmatpush1.bf16.msra.mxu0 0
  %135 = vmatprep.subr.bf16.mxu0 0
  %136 = vmatpush1.bf16.msra.mxu0 0
  %137 = vmatprep.subr.bf16.mxu0 0
  %138 = vmatpush1.bf16.msra.mxu0 0
  %139 = vmatprep.subr.bf16.mxu0 0
  %140 = vmatpush1.bf16.msra.mxu0 0
  %141 = vmatprep.subr.bf16.mxu0 0
  %142 = vmatpush1.bf16.msra.mxu0 0
  %143 = vmatprep.mubr.bf16.mxu0 0
  %144 = vmatmul.mubr.bf16.gmra.mrb[0].mxu0 %v100
  %v145 = vpop.f32.mrb[0].mxu0
  %v146 = vadd.f32 0.0, %v145
  %v147 = vpop.f32.mrb[0].mxu0
  %v148 = vpop.f32.mrb[0].mxu0
  %v149 = vadd.f32 0.0, %v148
  %v150 = vpop.f32.mrb[0].mxu0
  %151 = vmatprep.mubr.bf16.mxu0 0
  %152 = vmatmul.mubr.bf16.gmra.mrb[0].mxu0 %v103
  %v153 = vpop.f32.mrb[0].mxu0
  %v154 = vadd.f32 0.0, %v153
  %v155 = vpop.f32.mrb[0].mxu0
  %v156 = vpop.f32.mrb[0].mxu0
  %v157 = vadd.f32 0.0, %v156
  %v158 = vpop.f32.mrb[0].mxu0
  %159 = vmatprep.mubr.bf16.mxu0 0
  %160 = vmatmul.mubr.bf16.gmra.mrb[0].mxu0 %v106
  %v161 = vpop.f32.mrb[0].mxu0
  %v162 = vadd.f32 0.0, %v161
  %v163 = vpop.f32.mrb[0].mxu0
  %v164 = vpop.f32.mrb[0].mxu0
  %v165 = vadd.f32 0.0, %v164
  %v166 = vpop.f32.mrb[0].mxu0
  %167 = vmatprep.mubr.bf16.mxu0 0
  %168 = vmatmul.mubr.bf16.gmra.mrb[0].mxu0 %v109
  %v169 = vpop.f32.mrb[0].mxu0
  %v170 = vadd.f32 0.0, %v169
  %v171 = vpop.f32.mrb[0].mxu0
  %v172 = vpop.f32.mrb[0].mxu0
  %v173 = vadd.f32 0.0, %v172
  %v174 = vpop.f32.mrb[0].mxu0
  %175 = vdwg.mxu0
  %v176 = vmul.f32 %v146, %v71
  %v177 = vmul.f32 %v149, %v72
  %v178 = vmul.f32 %v154, %v73
  %v179 = vmul.f32 %v157, %v74
  %v180 = vmul.f32 %v162, %v75
  %v181 = vmul.f32 %v165, %v76
  %v182 = vmul.f32 %v170, %v77
  %v183 = vmul.f32 %v173, %v78
  %v184 = vpack.c.bf16 %v177, %v176
  %v185 = vpack.c.bf16 %v179, %v178
  %v186 = vpack.c.bf16 %v181, %v180
  %v187 = vpack.c.bf16 %v183, %v182
  %188 = vmatprep.subr.bf16.mxu0 0
  %189 = vmatpush1.bf16.msra.mxu0 %v184
  %190 = vmatprep.subr.bf16.mxu0 0
  %191 = vmatpush1.bf16.msra.mxu0 %v185
  %192 = vmatprep.subr.bf16.mxu0 0
  %193 = vmatpush1.bf16.msra.mxu0 %v186
  %194 = vmatprep.subr.bf16.mxu0 0
  %195 = vmatpush1.bf16.msra.mxu0 %v187
  %196 = vmatprep.subr.bf16.mxu0 0
  %197 = vmatpush1.bf16.msra.mxu0 0
  %198 = vmatprep.subr.bf16.mxu0 0
  %199 = vmatpush1.bf16.msra.mxu0 0
  %200 = vmatprep.subr.bf16.mxu0 0
  %201 = vmatpush1.bf16.msra.mxu0 0
  %202 = vmatprep.subr.bf16.mxu0 0
  %203 = vmatpush1.bf16.msra.mxu0 0
  %204 = vmatprep.subr.bf16.mxu0 0
  %205 = vmatpush1.bf16.msra.mxu0 0
  %206 = vmatprep.subr.bf16.mxu0 0
  %207 = vmatpush1.bf16.msra.mxu0 0
  %208 = vmatprep.subr.bf16.mxu0 0
  %209 = vmatpush1.bf16.msra.mxu0 0
  %210 = vmatprep.subr.bf16.mxu0 0
  %211 = vmatpush1.bf16.msra.mxu0 0
  %212 = vmatprep.subr.bf16.mxu0 0
  %213 = vmatpush1.bf16.msra.mxu0 0
  %214 = vmatprep.subr.bf16.mxu0 0
  %215 = vmatpush1.bf16.msra.mxu0 0
  %216 = vmatprep.subr.bf16.mxu0 0
  %217 = vmatpush1.bf16.msra.mxu0 0
  %218 = vmatprep.subr.bf16.mxu0 0
  %219 = vmatpush1.bf16.msra.mxu0 0
  %220 = vmatprep.mubr.bf16.mxu0 0
  %221 = vmatmul.mubr.bf16.gmra.mrb[0].mxu0 %v100
  %v222 = vpop.f32.mrb[0].mxu0
  %v223 = vadd.f32 0.0, %v222
  %v224 = vpop.f32.mrb[0].mxu0
  %v225 = vpop.f32.mrb[0].mxu0
  %v226 = vadd.f32 0.0, %v225
  %v227 = vpop.f32.mrb[0].mxu0
  %228 = vmatprep.mubr.bf16.mxu0 0
  %229 = vmatmul.mubr.bf16.gmra.mrb[0].mxu0 %v103
  %v230 = vpop.f32.mrb[0].mxu0
  %v231 = vadd.f32 0.0, %v230
  %v232 = vpop.f32.mrb[0].mxu0
  %v233 = vpop.f32.mrb[0].mxu0
  %v234 = vadd.f32 0.0, %v233
  %v235 = vpop.f32.mrb[0].mxu0
  %236 = vmatprep.mubr.bf16.mxu0 0
  %237 = vmatmul.mubr.bf16.gmra.mrb[0].mxu0 %v106
  %v238 = vpop.f32.mrb[0].mxu0
  %v239 = vadd.f32 0.0, %v238
  %v240 = vpop.f32.mrb[0].mxu0
  %v241 = vpop.f32.mrb[0].mxu0
  %v242 = vadd.f32 0.0, %v241
  %v243 = vpop.f32.mrb[0].mxu0
  %244 = vmatprep.mubr.bf16.mxu0 0
  %245 = vmatmul.mubr.bf16.gmra.mrb[0].mxu0 %v109
  %v246 = vpop.f32.mrb[0].mxu0
  %v247 = vadd.f32 0.0, %v246
  %v248 = vpop.f32.mrb[0].mxu0
  %v249 = vpop.f32.mrb[0].mxu0
  %v250 = vadd.f32 0.0, %v249
  %v251 = vpop.f32.mrb[0].mxu0
  %252 = vdwg.mxu0
  %v253 = vmul.f32 %v223, %v63
  %v254 = vmul.f32 %v226, %v64
  %v255 = vmul.f32 %v231, %v65
  %v256 = vmul.f32 %v234, %v66
  %v257 = vmul.f32 %v239, %v67
  %v258 = vmul.f32 %v242, %v68
  %v259 = vmul.f32 %v247, %v69
  %v260 = vmul.f32 %v250, %v70
  %v261 = vld [vmem:[%s2] sm:$0xf]
  %v262 = vld [vmem:[%s2 + $0x4] sm:$0xf]
  %v263 = vld [vmem:[%s3] sm:$0x1]
  %v264 = vpack.c.bf16 %v254, %v253
  %v265 = vpack.c.bf16 %v256, %v255
  %v266 = vpack.c.bf16 %v258, %v257
  %v267 = vpack.c.bf16 %v260, %v259
  %v269 = vlaneseq
  %v270 = vshrl.u32 %v269, 7
  %v271 = vsub.s32 0, %v270
  %v272 = vrot.slane %v263, %v271
  %v276 = vunpack.c.l.b16 %v261
  %v277 = vunpack.c.l.b16 %v262
  %v278 = vpack.c.b16 %v277, %v276
  %vm280 = vcmask 130048
  %v282 = vsel %vm280, %v264, 0
  %v285 = vsel %vm280, %v265, 0
  %v288 = vsel %vm280, %v266, 0
  %v291 = vsel %vm280, %v267, 0
  %293 = vmatprep.subr.bf16.mxu0 0
  %294 = vmatpush1.bf16.msra.mxu0 %v278
  %295 = vmatprep.subr.bf16.mxu0 0
  %296 = vmatpush1.bf16.msra.mxu0 0
  %297 = vmatprep.subr.bf16.mxu0 0
  %298 = vmatpush1.bf16.msra.mxu0 0
  %299 = vmatprep.subr.bf16.mxu0 0
  %300 = vmatpush1.bf16.msra.mxu0 0
  %301 = vmatprep.subr.bf16.mxu0 0
  %302 = vmatpush1.bf16.msra.mxu0 0
  %303 = vmatprep.subr.bf16.mxu0 0
  %304 = vmatpush1.bf16.msra.mxu0 0
  %305 = vmatprep.subr.bf16.mxu0 0
  %306 = vmatpush1.bf16.msra.mxu0 0
  %307 = vmatprep.subr.bf16.mxu0 0
  %308 = vmatpush1.bf16.msra.mxu0 0
  %309 = vmatprep.subr.bf16.mxu0 0
  %310 = vmatpush1.bf16.msra.mxu0 0
  %311 = vmatprep.subr.bf16.mxu0 0
  %312 = vmatpush1.bf16.msra.mxu0 0
  %313 = vmatprep.subr.bf16.mxu0 0
  %314 = vmatpush1.bf16.msra.mxu0 0
  %315 = vmatprep.subr.bf16.mxu0 0
  %316 = vmatpush1.bf16.msra.mxu0 0
  %317 = vmatprep.subr.bf16.mxu0 0
  %318 = vmatpush1.bf16.msra.mxu0 0
  %319 = vmatprep.subr.bf16.mxu0 0
  %320 = vmatpush1.bf16.msra.mxu0 0
  %321 = vmatprep.subr.bf16.mxu0 0
  %322 = vmatpush1.bf16.msra.mxu0 0
  %323 = vmatprep.subr.bf16.mxu0 0
  %324 = vmatpush1.bf16.msra.mxu0 0
  %325 = vmatprep.mubr.bf16.mxu0 0
  %326 = vmatmul.mubr.bf16.gmra.mrb[0].mxu0 %v282
  %v327 = vpop.f32.mrb[0].mxu0
  %v328 = vadd.f32 %v272, %v327
  %v329 = vpop.f32.mrb[0].mxu0
  %v330 = vpop.f32.mrb[0].mxu0
  %v331 = vadd.f32 %v272, %v330
  %v332 = vpop.f32.mrb[0].mxu0
  %333 = vmatprep.mubr.bf16.mxu0 0
  %334 = vmatmul.mubr.bf16.gmra.mrb[0].mxu0 %v285
  %v335 = vpop.f32.mrb[0].mxu0
  %v336 = vadd.f32 %v272, %v335
  %v337 = vpop.f32.mrb[0].mxu0
  %v338 = vpop.f32.mrb[0].mxu0
  %v339 = vadd.f32 %v272, %v338
  %v340 = vpop.f32.mrb[0].mxu0
  %341 = vmatprep.mubr.bf16.mxu0 0
  %342 = vmatmul.mubr.bf16.gmra.mrb[0].mxu0 %v288
  %v343 = vpop.f32.mrb[0].mxu0
  %v344 = vadd.f32 %v272, %v343
  %v345 = vpop.f32.mrb[0].mxu0
  %v346 = vpop.f32.mrb[0].mxu0
  %v347 = vadd.f32 %v272, %v346
  %v348 = vpop.f32.mrb[0].mxu0
  %349 = vmatprep.mubr.bf16.mxu0 0
  %350 = vmatmul.mubr.bf16.gmra.mrb[0].mxu0 %v291
  %v351 = vpop.f32.mrb[0].mxu0
  %v352 = vadd.f32 %v272, %v351
  %v353 = vpop.f32.mrb[0].mxu0
  %v354 = vpop.f32.mrb[0].mxu0
  %v355 = vadd.f32 %v272, %v354
  %v356 = vpop.f32.mrb[0].mxu0
  %357 = vdwg.mxu0
  %358 = vst [vmem:[%s4] sm:$0xff] %v328
  %359 = vst [vmem:[%s4 + $0x8] sm:$0xff] %v331
  %360 = vst [vmem:[%s4 + $0x10] sm:$0xff] %v336
  %361 = vst [vmem:[%s4 + $0x18] sm:$0xff] %v339
  %362 = vst [vmem:[%s4 + $0x20] sm:$0xff] %v344
  %363 = vst [vmem:[%s4 + $0x28] sm:$0xff] %v347
  %364 = vst [vmem:[%s4 + $0x30] sm:$0xff] %v352
  %365 = vst [vmem:[%s4 + $0x38] sm:$0xff] %v355
  // Predicated region
  $region18: #{forward.1} parent=0 // pred_check
    _
  $region19: #{forward.1} parent=0 // pred_check_branch
    %367 = sbr.rel (0) target = $region21
  $region20: #{forward.1} parent=0 // pred_region
    _
  $region21: #{forward.1} parent=0 // pred_fallthru
    _
  // Predicated region
  $region22: #{forward.1} parent=0 // pred_check
    _
  $region23: #{forward.1} parent=0 // pred_check_branch
    %369 = sbr.rel (0) target = $region25
  $region24: #{forward.1} parent=0 // pred_region
    _
  $region25: #{forward.1} parent=0 // pred_fallthru
    _

</llo_original>
